<compile_context>
chip_gen: v7x
topology: tpu7x:2x2x1
jax: 0.10.0
libtpu: 0.0.40
codegen_flags: <defaults>
</compile_context>

<pallas_src>
import functools

import jax
import jax.numpy as jnp
from jax import lax
from jax.experimental import pallas as pl
from jax.experimental.pallas import tpu as pltpu


def _sigmoid(z):
    # one EUP transcendental instead of exp + divide
    return 0.5 * jnp.tanh(0.5 * z) + 0.5


def yolo_decode_kernel(p_ref, out_ref, *, num_anchors, ch, grid_g, stride,
                       sxy_stride, off_px, anchor_w, anchor_h, tile_gg):
    """Decode one (batch, lane-tile) block: all anchors & channels at once.

    p_ref   : VMEM (A, Ch, TGG)  raw predictions, channel-major, spatial lane-dense
    out_ref : VMEM (A, Ch, TGG)  decoded output, channel-major:
              rows 0..3 = x,y,w,h in pixels, 4..5 = im,re, 6 = conf, 7.. = classes
    """
    a, tgg = num_anchors, tile_gg

    # row selector inside each (x,y) / (w,h) pair: True -> first row (x or w)
    sel_is_first = lax.broadcasted_iota(jnp.int32, (a, 2, tgg), 1) == 0

    # --- grid offsets for this lane tile, generated in-register (no input DMA) --
    lane = lax.broadcasted_iota(jnp.int32, (a, 2, tgg), 2) + pl.program_id(1) * tgg
    lane_f = lane.astype(jnp.float32)
    # exact floor-div by G via float trick (lane < 2^24, G is an integer)
    row_f = jnp.floor((lane_f + 0.5) * (1.0 / grid_g))
    col_f = lane_f - row_f * float(grid_g)
    # goff = (grid - 0.5*(scale_x_y-1)) * stride, already in pixels
    goff = jnp.where(sel_is_first, col_f, row_f) * stride - off_px      # (A,2,TGG)

    # --- x, y : sigmoid(t) * scale_x_y*stride + goff -----------------------------
    out_ref[:, 0:2, :] = (_sigmoid(p_ref[:, 0:2, :].astype(jnp.float32))
                          * sxy_stride + goff)

    # --- w, h : exp(t) * pixel anchors (exp confined to these 2 rows) ------------
    aidx = lax.broadcasted_iota(jnp.int32, (a, 2, tgg), 0)
    anchor_wh = jnp.zeros((a, 2, tgg), jnp.float32)
    for i in range(a):   # A is tiny & static: builds the per-row coefficient tile
        wh_i = jnp.where(sel_is_first, anchor_w[i], anchor_h[i])
        anchor_wh = jnp.where(aidx == i, wh_i, anchor_wh)
    out_ref[:, 2:4, :] = jnp.exp(p_ref[:, 2:4, :].astype(jnp.float32)) * anchor_wh

    # --- im, re : passthrough ----------------------------------------------------
    out_ref[:, 4:6, :] = p_ref[:, 4:6, :].astype(jnp.float32)

    # --- conf + classes : sigmoid, one fused lane-dense region -------------------
    if ch > 6:
        out_ref[:, 6:, :] = _sigmoid(p_ref[:, 6:, :].astype(jnp.float32))


def yolo_layer_forward(x, *, anchors, num_classes, scale_x_y, img_size,
                       max_lane_tile=2048):
    """Pallas implementation of YoloLayer.forward(x, targets=None, img_size)."""
    # TODO(synk): training branch (build_targets + masked MSE/BCE losses) uses
    # data-dependent boolean-mask gather/scatter over a variable number of boxes;
    # no clean Pallas equivalent, only the inference path is implemented.
    B, c_in, G, G2 = x.shape
    assert G == G2
    A = len(anchors)
    Ch = num_classes + 7
    assert c_in == A * Ch
    GG = G * G
    stride = float(img_size) / float(G)

    # Lane tile over GG: full GG when it fits (always a legal "full dim" block),
    # else a 128-multiple tile with a cdiv grid (Pallas masks the tail block).
    if GG <= max_lane_tile:
        TGG = GG
    else:
        TGG = max_lane_tile - (max_lane_tile % 128)
    n_gg = pl.cdiv(GG, TGG)

    # pixel-space anchors: (a_w/stride) * stride folds back to a_w
    anchor_w = tuple(float(a[0]) for a in anchors)
    anchor_h = tuple(float(a[1]) for a in anchors)

    # glue reshape only (no dtype cast, no copy): NCHW -> [B, A, 7+C, G*G]
    p = x.reshape(B, A, Ch, GG)

    kernel = functools.partial(
        yolo_decode_kernel,
        num_anchors=A, ch=Ch, grid_g=G, stride=stride,
        sxy_stride=float(scale_x_y) * stride,
        off_px=0.5 * (float(scale_x_y) - 1.0) * stride,
        anchor_w=anchor_w, anchor_h=anchor_h, tile_gg=TGG,
    )

    out_cm = pl.pallas_call(
        kernel,
        out_shape=jax.ShapeDtypeStruct((B, A, Ch, GG), jnp.float32),
        grid_spec=pltpu.PrefetchScalarGridSpec(
            num_scalar_prefetch=0,
            grid=(B, n_gg),
            in_specs=[pl.BlockSpec((None, A, Ch, TGG), lambda b, j: (b, 0, 0, j))],
            out_specs=pl.BlockSpec((None, A, Ch, TGG), lambda b, j: (b, 0, 0, j)),
        ),
        compiler_params=pltpu.CompilerParams(
            dimension_semantics=("parallel", "parallel"),
            vmem_limit_bytes=32 * 1024 * 1024),
    )(p)

    # PyTorch output layout [B, A*G*G, 7+C]: one XLA permute outside the kernel
    # (consumers that accept channel-major (B, A, Ch, GG) can skip this entirely).
    out = jnp.transpose(out_cm, (0, 1, 3, 2)).reshape(B, A * GG, Ch)
    return out, 0


def yolo_layer_reference(x, *, anchors, num_classes, scale_x_y, img_size):
    """Pure-JAX reference mirroring the PyTorch forward (targets=None)."""
    B, _, G, _ = x.shape
    A = len(anchors)
    Ch = num_classes + 7
    stride = float(img_size) / float(G)

    pred = x.reshape(B, A, Ch, G, G).transpose(0, 1, 3, 4, 2).astype(jnp.float32)
    sx = jax.nn.sigmoid(pred[..., 0]) * scale_x_y - 0.5 * (scale_x_y - 1)
    sy = jax.nn.sigmoid(pred[..., 1]) * scale_x_y - 0.5 * (scale_x_y - 1)
    w = pred[..., 2]
    h = pred[..., 3]
    im = pred[..., 4]
    re = pred[..., 5]
    conf = jax.nn.sigmoid(pred[..., 6])
    cls_ = jax.nn.sigmoid(pred[..., 7:])

    grid_x = jnp.tile(jnp.arange(G, dtype=jnp.float32), (G, 1)).reshape(1, 1, G, G)
    grid_y = jnp.tile(jnp.arange(G, dtype=jnp.float32), (G, 1)).T.reshape(1, 1, G, G)
    aw = jnp.asarray([a[0] / stride for a in anchors], jnp.float32).reshape(1, A, 1, 1)
    ah = jnp.asarray([a[1] / stride for a in anchors], jnp.float32).reshape(1, A, 1, 1)

    bx = sx + grid_x
    by = sy + grid_y
    bw = jnp.exp(w) * aw
    bh = jnp.exp(h) * ah

    boxes4 = jnp.stack([bx, by, bw, bh], axis=-1).reshape(B, -1, 4) * stride
    euler = jnp.stack([im, re], axis=-1).reshape(B, -1, 2)
    out = jnp.concatenate(
        [boxes4, euler, conf.reshape(B, -1, 1), cls_.reshape(B, -1, num_classes)],
        axis=-1)
    return out


if __name__ == "__main__":
    # Deterministic small config
    num_classes = 3
    anchors = [(1.08, 1.19, 0.0, 1.0), (3.42, 4.41, 0.0, 1.0)]  # (a_w, a_h, im, re)
    scale_x_y = 1.1
    ignore_thresh = 0.6      # unused in inference path
    img_size = 64
    B, G = 2, 16
    A = len(anchors)
    Ch = num_classes + 7     # 10

    key = jax.random.PRNGKey(0)
    x = jax.random.normal(key, (B, A * Ch, G, G), dtype=jnp.float32)

    out, _ = yolo_layer_forward(
        x, anchors=anchors, num_classes=num_classes,
        scale_x_y=scale_x_y, img_size=img_size)
    out = jax.block_until_ready(out)

    ref = yolo_layer_reference(
        x, anchors=anchors, num_classes=num_classes,
        scale_x_y=scale_x_y, img_size=img_size)

    assert out.shape == (B, A * G * G, Ch), out.shape
    assert jnp.allclose(out, ref, atol=1e-4, rtol=1e-4), "mismatch vs reference"
    print("KERNEL_OK")
</pallas_src>

<mosaic_0001>
module attributes {stable_mosaic.version = 11 : i64} {
  func.func @yolo_decode_kernel(%arg0: i32, %arg1: i32, %arg2: memref<1x2x10x256xf32, #tpu.memory_space<vmem>>, %arg3: memref<1x2x10x256xf32, #tpu.memory_space<vmem>>) attributes {dimension_semantics = [#tpu.dimension_semantics<parallel>, #tpu.dimension_semantics<parallel>], iteration_bounds = array<i64: 2, 1>, scalar_prefetch = 0 : i64, scratch_operands = 0 : i64, tpu.core_type = #tpu.core_type<tc>, window_params = [{transform_indices = @transform_0, window_bounds = array<i64: 1, 2, 10, 256>}, {transform_indices = @transform_1, window_bounds = array<i64: 1, 2, 10, 256>}]} {
    %0 = tpu.iota {dimensions = array<i32: 1>} : vector<2x2x256xi32>
    %c0_i32 = arith.constant 0 : i32
    %1 = vector.broadcast %c0_i32 : i32 to vector<2x2x256xi32>
    %2 = arith.cmpi eq, %0, %1 : vector<2x2x256xi32>
    %3 = tpu.iota {dimensions = array<i32: 2>} : vector<2x2x256xi32>
    %c256_i32 = arith.constant 256 : i32
    %4 = arith.muli %arg1, %c256_i32 : i32
    %5 = vector.broadcast %4 : i32 to vector<2x2x256xi32>
    %6 = arith.addi %3, %5 : vector<2x2x256xi32>
    %7 = arith.sitofp %6 : vector<2x2x256xi32> to vector<2x2x256xf32>
    %cst = arith.constant 5.000000e-01 : f32
    %8 = vector.broadcast %cst : f32 to vector<2x2x256xf32>
    %9 = arith.addf %7, %8 : vector<2x2x256xf32>
    %cst_0 = arith.constant 6.250000e-02 : f32
    %10 = vector.broadcast %cst_0 : f32 to vector<2x2x256xf32>
    %11 = arith.mulf %9, %10 : vector<2x2x256xf32>
    %12 = math.floor %11 : vector<2x2x256xf32>
    %cst_1 = arith.constant 1.600000e+01 : f32
    %13 = vector.broadcast %cst_1 : f32 to vector<2x2x256xf32>
    %14 = arith.mulf %12, %13 : vector<2x2x256xf32>
    %15 = arith.subf %7, %14 : vector<2x2x256xf32>
    %16 = arith.select %2, %15, %12 : vector<2x2x256xi1>, vector<2x2x256xf32>
    %cst_2 = arith.constant 4.000000e+00 : f32
    %17 = vector.broadcast %cst_2 : f32 to vector<2x2x256xf32>
    %18 = arith.mulf %16, %17 : vector<2x2x256xf32>
    %cst_3 = arith.constant 2.000000e-01 : f32
    %19 = vector.broadcast %cst_3 : f32 to vector<2x2x256xf32>
    %20 = arith.subf %18, %19 : vector<2x2x256xf32>
    %c0 = arith.constant 0 : index
    %c0_4 = arith.constant 0 : index
    %c0_5 = arith.constant 0 : index
    %c0_6 = arith.constant 0 : index
    %21 = vector.load %arg2[%c0, %c0_4, %c0_5, %c0_6] : memref<1x2x10x256xf32, #tpu.memory_space<vmem>>, vector<1x2x2x256xf32>
    %22 = vector.shape_cast %21 : vector<1x2x2x256xf32> to vector<2x2x256xf32>
    %cst_7 = arith.constant 5.000000e-01 : f32
    %23 = vector.broadcast %cst_7 : f32 to vector<2x2x256xf32>
    %24 = arith.mulf %23, %22 : vector<2x2x256xf32>
    %25 = math.tanh %24 : vector<2x2x256xf32>
    %cst_8 = arith.constant 5.000000e-01 : f32
    %26 = vector.broadcast %cst_8 : f32 to vector<2x2x256xf32>
    %27 = arith.mulf %26, %25 : vector<2x2x256xf32>
    %cst_9 = arith.constant 5.000000e-01 : f32
    %28 = vector.broadcast %cst_9 : f32 to vector<2x2x256xf32>
    %29 = arith.addf %27, %28 : vector<2x2x256xf32>
    %cst_10 = arith.constant 4.400000e+00 : f32
    %30 = vector.broadcast %cst_10 : f32 to vector<2x2x256xf32>
    %31 = arith.mulf %29, %30 : vector<2x2x256xf32>
    %32 = arith.addf %31, %20 : vector<2x2x256xf32>
    %c0_11 = arith.constant 0 : index
    %c0_12 = arith.constant 0 : index
    %c0_13 = arith.constant 0 : index
    %c0_14 = arith.constant 0 : index
    %33 = vector.load %arg3[%c0_11, %c0_12, %c0_13, %c0_14] : memref<1x2x10x256xf32, #tpu.memory_space<vmem>>, vector<1x2x2x256xf32>
    %34 = vector.shape_cast %33 : vector<1x2x2x256xf32> to vector<2x2x256xf32>
    %35 = vector.shape_cast %32 : vector<2x2x256xf32> to vector<1x2x2x256xf32>
    tpu.vector_store %arg3[%c0_11, %c0_12, %c0_13, %c0_14], %35 {strides = array<i32>} : memref<1x2x10x256xf32, #tpu.memory_space<vmem>>, vector<1x2x2x256xf32>,
    %36 = tpu.iota {dimensions = array<i32: 0>} : vector<2x2x256xi32>
    %cst_15 = arith.constant 0.000000e+00 : f32
    %37 = vector.broadcast %cst_15 : f32 to vector<2x2x256xf32>
    %cst_16 = arith.constant 1.080000e+00 : f32
    %cst_17 = arith.constant 1.190000e+00 : f32
    %38 = vector.broadcast %cst_16 : f32 to vector<2x2x256xf32>
    %39 = vector.broadcast %cst_17 : f32 to vector<2x2x256xf32>
    %40 = arith.select %2, %38, %39 : vector<2x2x256xi1>, vector<2x2x256xf32>
    %c0_i32_18 = arith.constant 0 : i32
    %41 = vector.broadcast %c0_i32_18 : i32 to vector<2x2x256xi32>
    %42 = arith.cmpi eq, %36, %41 : vector<2x2x256xi32>
    %43 = arith.select %42, %40, %37 : vector<2x2x256xi1>, vector<2x2x256xf32>
    %cst_19 = arith.constant 3.420000e+00 : f32
    %cst_20 = arith.constant 4.410000e+00 : f32
    %44 = vector.broadcast %cst_19 : f32 to vector<2x2x256xf32>
    %45 = vector.broadcast %cst_20 : f32 to vector<2x2x256xf32>
    %46 = arith.select %2, %44, %45 : vector<2x2x256xi1>, vector<2x2x256xf32>
    %c1_i32 = arith.constant 1 : i32
    %47 = vector.broadcast %c1_i32 : i32 to vector<2x2x256xi32>
    %48 = arith.cmpi eq, %36, %47 : vector<2x2x256xi32>
    %49 = arith.select %48, %46, %43 : vector<2x2x256xi1>, vector<2x2x256xf32>
    %c0_21 = arith.constant 0 : index
    %c0_22 = arith.constant 0 : index
    %c2 = arith.constant 2 : index
    %c0_23 = arith.constant 0 : index
    %50 = vector.load %arg2[%c0_21, %c0_22, %c2, %c0_23] : memref<1x2x10x256xf32, #tpu.memory_space<vmem>>, vector<1x2x2x256xf32>
    %51 = vector.shape_cast %50 : vector<1x2x2x256xf32> to vector<2x2x256xf32>
    %52 = math.exp %51 : vector<2x2x256xf32>
    %53 = arith.mulf %52, %49 : vector<2x2x256xf32>
    %c0_24 = arith.constant 0 : index
    %c0_25 = arith.constant 0 : index
    %c2_26 = arith.constant 2 : index
    %c0_27 = arith.constant 0 : index
    %54 = vector.load %arg3[%c0_24, %c0_25, %c2_26, %c0_27] : memref<1x2x10x256xf32, #tpu.memory_space<vmem>>, vector<1x2x2x256xf32>
    %55 = vector.shape_cast %54 : vector<1x2x2x256xf32> to vector<2x2x256xf32>
    %56 = vector.shape_cast %53 : vector<2x2x256xf32> to vector<1x2x2x256xf32>
    tpu.vector_store %arg3[%c0_24, %c0_25, %c2_26, %c0_27], %56 {strides = array<i32>} : memref<1x2x10x256xf32, #tpu.memory_space<vmem>>, vector<1x2x2x256xf32>,
    %c0_28 = arith.constant 0 : index
    %c0_29 = arith.constant 0 : index
    %c4 = arith.constant 4 : index
    %c0_30 = arith.constant 0 : index
    %57 = vector.load %arg2[%c0_28, %c0_29, %c4, %c0_30] : memref<1x2x10x256xf32, #tpu.memory_space<vmem>>, vector<1x2x2x256xf32>
    %58 = vector.shape_cast %57 : vector<1x2x2x256xf32> to vector<2x2x256xf32>
    %c0_31 = arith.constant 0 : index
    %c0_32 = arith.constant 0 : index
    %c4_33 = arith.constant 4 : index
    %c0_34 = arith.constant 0 : index
    %59 = vector.load %arg3[%c0_31, %c0_32, %c4_33, %c0_34] : memref<1x2x10x256xf32, #tpu.memory_space<vmem>>, vector<1x2x2x256xf32>
    %60 = vector.shape_cast %59 : vector<1x2x2x256xf32> to vector<2x2x256xf32>
    %61 = vector.shape_cast %58 : vector<2x2x256xf32> to vector<1x2x2x256xf32>
    tpu.vector_store %arg3[%c0_31, %c0_32, %c4_33, %c0_34], %61 {strides = array<i32>} : memref<1x2x10x256xf32, #tpu.memory_space<vmem>>, vector<1x2x2x256xf32>,
    %c0_35 = arith.constant 0 : index
    %c0_36 = arith.constant 0 : index
    %c6 = arith.constant 6 : index
    %c0_37 = arith.constant 0 : index
    %62 = vector.load %arg2[%c0_35, %c0_36, %c6, %c0_37] : memref<1x2x10x256xf32, #tpu.memory_space<vmem>>, vector<1x2x4x256xf32>
    %63 = vector.shape_cast %62 : vector<1x2x4x256xf32> to vector<2x4x256xf32>
    %cst_38 = arith.constant 5.000000e-01 : f32
    %64 = vector.broadcast %cst_38 : f32 to vector<2x4x256xf32>
    %65 = arith.mulf %64, %63 : vector<2x4x256xf32>
    %66 = math.tanh %65 : vector<2x4x256xf32>
    %cst_39 = arith.constant 5.000000e-01 : f32
    %67 = vector.broadcast %cst_39 : f32 to vector<2x4x256xf32>
    %68 = arith.mulf %67, %66 : vector<2x4x256xf32>
    %cst_40 = arith.constant 5.000000e-01 : f32
    %69 = vector.broadcast %cst_40 : f32 to vector<2x4x256xf32>
    %70 = arith.addf %68, %69 : vector<2x4x256xf32>
    %c0_41 = arith.constant 0 : index
    %c0_42 = arith.constant 0 : index
    %c6_43 = arith.constant 6 : index
    %c0_44 = arith.constant 0 : index
    %71 = vector.load %arg3[%c0_41, %c0_42, %c6_43, %c0_44] : memref<1x2x10x256xf32, #tpu.memory_space<vmem>>, vector<1x2x4x256xf32>
    %72 = vector.shape_cast %71 : vector<1x2x4x256xf32> to vector<2x4x256xf32>
    %73 = vector.shape_cast %70 : vector<2x4x256xf32> to vector<1x2x4x256xf32>
    tpu.vector_store %arg3[%c0_41, %c0_42, %c6_43, %c0_44], %73 {strides = array<i32>} : memref<1x2x10x256xf32, #tpu.memory_space<vmem>>, vector<1x2x4x256xf32>,
    return
  }
  func.func @transform_0(%arg0: i32, %arg1: i32) -> (i32, i32, i32, i32) {
    %c0_i32 = arith.constant 0 : i32
    %c0_i32_0 = arith.constant 0 : i32
    %c0_i32_1 = arith.constant 0 : i32
    return %arg0, %c0_i32, %c0_i32_0, %arg1 : i32, i32, i32, i32
  }
  func.func @transform_1(%arg0: i32, %arg1: i32) -> (i32, i32, i32, i32) {
    %c0_i32 = arith.constant 0 : i32
    %c0_i32_0 = arith.constant 0 : i32
    %c0_i32_1 = arith.constant 0 : i32
    return %arg0, %c0_i32, %c0_i32_0, %arg1 : i32, i32, i32, i32
  }
}

</mosaic_0001>

<llo_original>
// kernel: tpu_custom_call.1
$region0: #{tpu_custom_call.1}
  #allocation0 [shape = 'u32[]', space=smem, size = 0x4, offset = 0x4, fixed_abs, tag = 'smem constant byte address 0x4 - core index']
  #allocation1 [shape = 'u32[144,128]{1,0:T(1,128)}', space=vmem, size = 0x12000, scoped, tag = 'internal scratch']
  %s0 = inlined_call_operand.vmem [shape: f32[2,2,10,256], index: 0, kind: input, shape index: {}]
  %s1 = inlined_call_operand.vmem [shape: f32[2,2,10,256], index: 1, kind: output, shape index: {}]
  %s2 = sld [smem:[#allocation0]]
  $region37: #{tpu_custom_call.1} parent=0
    _
  %s4 = ssub.s32 1, %s2
  %s5 = scalar_select 0, %s4, %s2
  loop: start=0, step=1, limit=4
  $region2: #{tpu_custom_call.1} parent=0 // loop_pre_header
    _
  $region3: #{tpu_custom_call.1} parent=0 // loop_header
    %s7 = sphi 0, %s11
    %p8 = scmp.ge.s32.totalorder %s7, 4
    %s14 = sphi 0, %s26
    %s15 = sphi 0, %s22
    %s16 = sphi 0, %s14
    %s17 = sphi 0, %s15
    %s18 = sphi 0, %s16
    %s19 = sphi 0, %s17
    %s31 = sphi 0, %s33
    %s34 = sphi 0, %s31
    %s35 = sphi 0, %s34
    %s51 = sphi 0, %s35
    %s59 = sphi 0, %s61
    %s62 = sphi 0, %s59
    %s63 = sphi 0, %s62
    %s79 = sphi 0, %s63
  $region4: #{tpu_custom_call.1} parent=0 // loop_header_branch
    %10 = sbr.rel (%p8) target = $region8
  $region5: #{tpu_custom_call.1} parent=0 // loop_body
    %s12 = ssub.s32 %s7, 1
    %s13 = ssub.s32 %s7, 2
    %s20 = sadd.s32 1, %s15
    %p21 = scmp.ge.s32.totalorder %s20, 1
    %s22 = scalar_select %p21, 0, %s20
    %s23 = sadd.s32 1, %s14
    %s24 = scalar_select %p21, %s23, %s14
    %p25 = scmp.ge.s32.totalorder %s24, 2
    %s26 = scalar_select %p25, 0, %s24
    %s27 = ssub.s32 %s14, %s26
    %s28 = ssub.s32 %s15, %s22
    %s29 = sor.u32 %s27, %s28
    %p30 = scmp.eq.s32.totalorder %s29, 0
    %s32 = sadd.s32 %s31, 1
    %s33 = scalar_select %p30, %s31, %s32
    %p36 = pneg %p30
    %p37 = scmp.eq.s32.totalorder %s7, 1
    %p38 = por %p36, %p37
    %p39 = scmp.ne.s32.totalorder %s31, %s34
    %p40 = scmp.eq.s32.totalorder %s7, 0
    %p41 = por %p39, %p40
    %p42 = scmp.ne.s32.totalorder %s31, %s34
    %p43 = scmp.eq.s32.totalorder %s12, 1
    %p44 = por %p42, %p43
    %p45 = scmp.ne.s32.totalorder %s34, %s35
    %p46 = scmp.eq.s32.totalorder %s12, 0
    %p47 = por %p45, %p46
    %p48 = scmp.ne.s32.totalorder %s34, %s35
    %p49 = scmp.eq.s32.totalorder %s13, 1
    %p50 = por %p48, %p49
    %p52 = scmp.ne.s32.totalorder %s35, %s51
    %p53 = scmp.eq.s32.totalorder %s13, 0
    %p54 = por %p52, %p53
    %s55 = ssub.s32 %s14, %s26
    %s56 = ssub.s32 %s15, %s22
    %s57 = sor.u32 %s55, %s56
    %p58 = scmp.eq.s32.totalorder %s57, 0
    %s60 = sadd.s32 %s59, 1
    %s61 = scalar_select %p58, %s59, %s60
    %p64 = pneg %p58
    %p65 = scmp.eq.s32.totalorder %s7, 1
    %p66 = por %p64, %p65
    %p67 = scmp.ne.s32.totalorder %s59, %s62
    %p68 = scmp.eq.s32.totalorder %s7, 0
    %p69 = por %p67, %p68
    %p70 = scmp.ne.s32.totalorder %s59, %s62
    %p71 = scmp.eq.s32.totalorder %s12, 1
    %p72 = por %p70, %p71
    %p73 = scmp.ne.s32.totalorder %s62, %s63
    %p74 = scmp.eq.s32.totalorder %s12, 0
    %p75 = por %p73, %p74
    %p76 = scmp.ne.s32.totalorder %s62, %s63
    %p77 = scmp.eq.s32.totalorder %s13, 1
    %p78 = por %p76, %p77
    %p80 = scmp.ne.s32.totalorder %s63, %s79
    %p81 = scmp.eq.s32.totalorder %s13, 0
    %p82 = por %p80, %p81
    %p83 = scmp.le.s32.totalorder 1, %s7
    %p84 = scmp.lt.s32.totalorder %s7, 3
    %p85 = pnand %p83, %p84
    %p86 = pneg %p85
    // Predicated region
    $region9: #{tpu_custom_call.1} parent=5 // pred_check
      _
    $region10: #{tpu_custom_call.1} parent=5 // pred_check_branch
      %88 = sbr.rel (%p85) target = $region12
    $region11: #{tpu_custom_call.1} parent=5 // pred_region
      %s89 = ssub.s32 %s7, 1
    $region12: #{tpu_custom_call.1} parent=5 // pred_fallthru
      _
    %p90 = scmp.lt.s32.totalorder %s7, 2
    // Predicated region
    $region13: #{tpu_custom_call.1} parent=5 // pred_check
      %p91 = pneg %p90
    $region14: #{tpu_custom_call.1} parent=5 // pred_check_branch
      %93 = sbr.rel (%p91) target = $region16
    $region15: #{tpu_custom_call.1} parent=5 // pred_region
      // Predicated region
      $region17: #{tpu_custom_call.1} parent=15 // pred_check
        %p94 = pneg %p41
      $region18: #{tpu_custom_call.1} parent=15 // pred_check_branch
        %96 = sbr.rel (%p94) target = $region20
      $region19: #{tpu_custom_call.1} parent=15 // pred_region
        %s97 = smul.u32 2, %s15
        %p98 = scmp.lt.s32.totalorder %s14, 1
        %s99 = scalar_select %p98, %s14, 1
        %p100 = scmp.lt.s32.totalorder %s97, 1
        %s101 = scalar_select %p100, %s97, 1
        %s102 = smul.addr %s99, 8
        %s103 = sadd.s32 %s101, %s102
        %s104 = smul.addr %s103, 8
        %s105 = scalar_lea.vmem %s0, %s104
        %s106 = smul.u32 2, %s15
      $region20: #{tpu_custom_call.1} parent=15 // pred_fallthru
        _
    $region16: #{tpu_custom_call.1} parent=5 // pred_fallthru
      _
    %p107 = scmp.le.s32.totalorder 1, %s7
    %p108 = scmp.lt.s32.totalorder %s7, 3
    %p109 = pnand %p107, %p108
    %p110 = pneg %p109
    // Predicated region
    $region21: #{tpu_custom_call.1} parent=5 // pred_check
      _
    $region22: #{tpu_custom_call.1} parent=5 // pred_check_branch
      %112 = sbr.rel (%p109) target = $region24
    $region23: #{tpu_custom_call.1} parent=5 // pred_region
      %s113 = ssub.s32 %s7, 1
      %s114 = smul.u32 2, %s17
      %p115 = scmp.lt.s32.totalorder %s16, 1
      %s116 = scalar_select %p115, %s16, 1
      %p117 = scmp.lt.s32.totalorder %s114, 1
      %s118 = scalar_select %p117, %s114, 1
      %s119 = smul.addr %s116, 8
      %s120 = sadd.s32 %s118, %s119
      %s121 = smul.addr %s120, 8
      %s122 = scalar_lea.vmem %s0, %s121
      %p123 = pneg %p47
      %p124 = pneg %p44
      %p125 = pneg %p75
      %p126 = pneg %p72
      %s127 = smul.u32 2, %s17
      %p128 = scmp.lt.s32.totalorder %s16, 1
      %s129 = scalar_select %p128, %s16, 1
      %p130 = scmp.lt.s32.totalorder %s127, 1
      %s131 = scalar_select %p130, %s127, 1
      %s132 = smul.addr %s129, 8
      %s133 = sadd.s32 %s131, %s132
      %s134 = smul.addr %s133, 8
      %s135 = scalar_lea.vmem %s1, %s134
      %s136 = smul.u32 2, %s17
      %p137 = scmp.lt.s32.totalorder %s16, 1
      %s138 = scalar_select %p137, %s16, 1
      %p139 = scmp.lt.s32.totalorder %s136, 1
      %s140 = scalar_select %p139, %s136, 1
      %s141 = smul.addr %s138, 8
      %s142 = sadd.s32 %s140, %s141
      %s143 = smul.addr %s142, 8
      %s144 = scalar_lea.vmem %s0, %s143
      %s145 = smul.u32 2, %s17
      %s146 = smul.u32 2, %s17
      %p147 = scmp.lt.s32.totalorder %s16, 1
      %s148 = scalar_select %p147, %s16, 1
      %p149 = scmp.lt.s32.totalorder %s146, 1
      %s150 = scalar_select %p149, %s146, 1
      %s151 = smul.addr %s148, 8
      %s152 = sadd.s32 %s150, %s151
      %s153 = smul.addr %s152, 8
      %s154 = scalar_lea.vmem %s1, %s153
      %s155 = smul.u32 2, %s17
      %v156 = vlaneseq
      %v157 = vshrl.u32 %v156, 7
      %vm158 = vcmp.eq.s32.totalorder %v157, 0
      %v159 = vlaneseq
      %v160 = vand.u32 %v159, 127
      %v161 = vadd.s32 %v160, 128
      %s162 = smul.u32 %s17, 256
      %v163 = vstv %s162
      %v164 = vadd.s32 %v160, %v163
      %v165 = vadd.s32 %v161, %v163
      %v166 = vcvt.s32.f32 %v164
      %v167 = vcvt.s32.f32 %v165
      %v168 = vadd.f32 %v166, 0.5
      %v169 = vadd.f32 %v167, 0.5
      %v170 = vmul.f32 %v168, 0.0625
      %v171 = vmul.f32 %v169, 0.0625
      %v172 = vfloor.f32 %v170
      %v173 = vfloor.f32 %v171
      %v174 = vmul.f32 %v172, 16.0
      %v175 = vmul.f32 %v173, 16.0
      %v176 = vsub.f32 %v166, %v174
      %v177 = vsub.f32 %v167, %v175
      %v178 = vsel %vm158, %v176, %v172
      %v179 = vsel %vm158, %v177, %v173
      %v180 = vmul.f32 %v178, 4.0
      %v181 = vmul.f32 %v179, 4.0
      %v182 = vsub.f32 %v180, 0.2
      %v183 = vsub.f32 %v181, 0.2
      %v184 = vld [vmem:[%s144] sm:$0x3]
      %v185 = vld [vmem:[%s144 + $0x8] sm:$0x3]
      %v186 = vld [vmem:[%s144 + $0x20] sm:$0x3]
      %v187 = vld [vmem:[%s144 + $0x28] sm:$0x3]
      %v188 = vmul.f32 %v184, 0.5
      %v189 = vmul.f32 %v185, 0.5
      %v190 = vmul.f32 %v186, 0.5
      %v191 = vmul.f32 %v187, 0.5
      %v192 = vtanh.pop %v188
      %v193 = vtanh.pop %v189
      %v194 = vtanh.pop %v190
      %v195 = vtanh.pop %v191
      %v196 = vmul.f32 %v192, 0.5
      %v197 = vmul.f32 %v193, 0.5
      %v198 = vmul.f32 %v194, 0.5
      %v199 = vmul.f32 %v195, 0.5
      %v200 = vadd.f32 %v196, 0.5
      %v201 = vadd.f32 %v197, 0.5
      %v202 = vadd.f32 %v198, 0.5
      %v203 = vadd.f32 %v199, 0.5
      %v204 = vmul.f32 %v200, 4.4
      %v205 = vmul.f32 %v201, 4.4
      %v206 = vmul.f32 %v202, 4.4
      %v207 = vmul.f32 %v203, 4.4
      %v208 = vadd.f32 %v204, %v182
      %v209 = vadd.f32 %v205, %v183
      %v210 = vadd.f32 %v206, %v182
      %v211 = vadd.f32 %v207, %v183
      %212 = vst [vmem:[%s154] sm:$0x3] %v208
      %213 = vst [vmem:[%s154 + $0x8] sm:$0x3] %v209
      %214 = vst [vmem:[%s154 + $0x20] sm:$0x3] %v210
      %215 = vst [vmem:[%s154 + $0x28] sm:$0x3] %v211
      %v216 = vsel %vm158, 1.08, 1.19
      %v217 = vsel 1, %v216, 0.0
      %v218 = vsel 0, %v216, 0.0
      %v219 = vsel %vm158, 3.42, 4.41
      %v220 = vsel 0, %v219, %v217
      %v221 = vsel 1, %v219, %v218
      %v222 = vld [vmem:[%s144] sm:$0xc]
      %v223 = vld [vmem:[%s144 + $0x8] sm:$0xc]
      %v224 = vld [vmem:[%s144 + $0x20] sm:$0xc]
      %v225 = vld [vmem:[%s144 + $0x28] sm:$0xc]
      %v226 = vmul.f32 %v222, 1.442695
      %v227 = vpow.pop %v226
      %v228 = vmul.f32 %v223, 1.442695
      %v229 = vpow.pop %v228
      %v230 = vmul.f32 %v224, 1.442695
      %v231 = vpow.pop %v230
      %v232 = vmul.f32 %v225, 1.442695
      %v233 = vpow.pop %v232
      %v236 = vrot.slane %v220, 6
      %v237 = vrot.slane %v221, 6
      %v240 = vmul.f32 %v227, %v236
      %v241 = vmul.f32 %v229, %v236
      %v242 = vmul.f32 %v231, %v237
      %v243 = vmul.f32 %v233, %v237
      %244 = vst [vmem:[%s154] sm:$0xc] %v240
      %245 = vst [vmem:[%s154 + $0x8] sm:$0xc] %v241
      %246 = vst [vmem:[%s154 + $0x20] sm:$0xc] %v242
      %247 = vst [vmem:[%s154 + $0x28] sm:$0xc] %v243
      %v248 = vld [vmem:[%s144] sm:$0x30]
      %v249 = vld [vmem:[%s144 + $0x8] sm:$0x30]
      %v250 = vld [vmem:[%s144 + $0x20] sm:$0x30]
      %v251 = vld [vmem:[%s144 + $0x28] sm:$0x30]
      %252 = vst [vmem:[%s154] sm:$0x30] %v248
      %253 = vst [vmem:[%s154 + $0x8] sm:$0x30] %v249
      %254 = vst [vmem:[%s154 + $0x20] sm:$0x30] %v250
      %255 = vst [vmem:[%s154 + $0x28] sm:$0x30] %v251
      %v256 = vld [vmem:[%s144] sm:$0xc0]
      %v257 = vld [vmem:[%s144 + $0x8] sm:$0xc0]
      %v258 = vld [vmem:[%s144 + $0x10] sm:$0x3]
      %v259 = vld [vmem:[%s144 + $0x18] sm:$0x3]
      %v260 = vld [vmem:[%s144 + $0x20] sm:$0xc0]
      %v261 = vld [vmem:[%s144 + $0x28] sm:$0xc0]
      %v262 = vld [vmem:[%s144 + $0x30] sm:$0x3]
      %v263 = vld [vmem:[%s144 + $0x38] sm:$0x3]
      %v264 = vmul.f32 %v256, 0.5
      %v265 = vmul.f32 %v257, 0.5
      %v266 = vmul.f32 %v258, 0.5
      %v267 = vmul.f32 %v259, 0.5
      %v268 = vmul.f32 %v260, 0.5
      %v269 = vmul.f32 %v261, 0.5
      %v270 = vmul.f32 %v262, 0.5
      %v271 = vmul.f32 %v263, 0.5
      %v272 = vtanh.pop %v264
      %v273 = vtanh.pop %v265
      %v274 = vtanh.pop %v266
      %v275 = vtanh.pop %v267
      %v276 = vtanh.pop %v268
      %v277 = vtanh.pop %v269
      %v278 = vtanh.pop %v270
      %v279 = vtanh.pop %v271
      %v280 = vmul.f32 %v272, 0.5
      %v281 = vmul.f32 %v273, 0.5
      %v282 = vmul.f32 %v274, 0.5
      %v283 = vmul.f32 %v275, 0.5
      %v284 = vmul.f32 %v276, 0.5
      %v285 = vmul.f32 %v277, 0.5
      %v286 = vmul.f32 %v278, 0.5
      %v287 = vmul.f32 %v279, 0.5
      %v288 = vadd.f32 %v280, 0.5
      %v289 = vadd.f32 %v281, 0.5
      %v290 = vadd.f32 %v282, 0.5
      %v291 = vadd.f32 %v283, 0.5
      %v292 = vadd.f32 %v284, 0.5
      %v293 = vadd.f32 %v285, 0.5
      %v294 = vadd.f32 %v286, 0.5
      %v295 = vadd.f32 %v287, 0.5
      %296 = vst [vmem:[%s154] sm:$0xc0] %v288
      %297 = vst [vmem:[%s154 + $0x8] sm:$0xc0] %v289
      %298 = vst [vmem:[%s154 + $0x10] sm:$0x3] %v290
      %299 = vst [vmem:[%s154 + $0x18] sm:$0x3] %v291
      %300 = vst [vmem:[%s154 + $0x20] sm:$0xc0] %v292
      %301 = vst [vmem:[%s154 + $0x28] sm:$0xc0] %v293
      %302 = vst [vmem:[%s154 + $0x30] sm:$0x3] %v294
      %303 = vst [vmem:[%s154 + $0x38] sm:$0x3] %v295
      %s304 = smul.u32 2, %s17
      %p305 = scmp.lt.s32.totalorder %s16, 1
      %s306 = scalar_select %p305, %s16, 1
      %p307 = scmp.lt.s32.totalorder %s304, 1
      %s308 = scalar_select %p307, %s304, 1
      %s309 = smul.addr %s306, 8
      %s310 = sadd.s32 %s308, %s309
      %s311 = smul.addr %s310, 8
      %s312 = scalar_lea.vmem %s1, %s311
      // Predicated region
      $region25: #{tpu_custom_call.1} parent=23 // pred_check
        %p313 = pneg %p72
      $region26: #{tpu_custom_call.1} parent=23 // pred_check_branch
        %315 = sbr.rel (%p313) target = $region28
      $region27: #{tpu_custom_call.1} parent=23 // pred_region
        %s316 = smul.u32 2, %s17
      $region28: #{tpu_custom_call.1} parent=23 // pred_fallthru
        _
    $region24: #{tpu_custom_call.1} parent=5 // pred_fallthru
      _
    %p317 = scmp.le.s32.totalorder 2, %s7
    // Predicated region
    $region29: #{tpu_custom_call.1} parent=5 // pred_check
      %p318 = pneg %p317
    $region30: #{tpu_custom_call.1} parent=5 // pred_check_branch
      %320 = sbr.rel (%p318) target = $region32
    $region31: #{tpu_custom_call.1} parent=5 // pred_region
      %s321 = ssub.s32 %s7, 2
      // Predicated region
      $region33: #{tpu_custom_call.1} parent=31 // pred_check
        %p322 = pneg %p78
      $region34: #{tpu_custom_call.1} parent=31 // pred_check_branch
        %324 = sbr.rel (%p322) target = $region36
      $region35: #{tpu_custom_call.1} parent=31 // pred_region
        %s325 = smul.u32 2, %s19
        %p326 = scmp.lt.s32.totalorder %s18, 1
        %s327 = scalar_select %p326, %s18, 1
        %p328 = scmp.lt.s32.totalorder %s325, 1
        %s329 = scalar_select %p328, %s325, 1
        %s330 = smul.addr %s327, 8
        %s331 = sadd.s32 %s329, %s330
        %s332 = smul.addr %s331, 8
        %s333 = scalar_lea.vmem %s1, %s332
      $region36: #{tpu_custom_call.1} parent=31 // pred_fallthru
        _
    $region32: #{tpu_custom_call.1} parent=5 // pred_fallthru
      _
  $region6: #{tpu_custom_call.1} parent=0 // loop_footer
    %s11 = sadd.s32 1, %s7
  $region7: #{tpu_custom_call.1} parent=0 // loop_footer_branch
    %6 = sbr.rel target = $region3
  $region8: #{tpu_custom_call.1} parent=0 // loop_exit
    _

</llo_original>
